<compile_context>
chip_gen: v7x
topology: tpu7x:2x2x1
jax: 0.10.0
libtpu: 0.0.40
codegen_flags: <defaults>
</compile_context>

<pallas_src>
import numpy as np

import jax
import jax.numpy as jnp
from jax import lax
from jax.experimental import pallas as pl
from jax.experimental.pallas import tpu as pltpu


def _attn_net_kernel(x_ref, w1_ref, b1_ref, w2_ref, b2_ref, a_ref):
    # In-kernel bf16 cast of the streamed x tile (VPU work, hidden under DMA).
    x = x_ref[...].astype(jnp.bfloat16)

    # h = tanh(x @ W1^T + b1) : (tile_n, D_pad); bf16 MXU inputs, f32 accum.
    h = jnp.dot(x, w1_ref[...], preferred_element_type=jnp.float32)
    h = jnp.tanh(h + b1_ref[...])                      # f32 bias add + EUP tanh

    # A^T = W2 @ h^T + b2 : (C_pad, tile_n) -> lane-dense along tile_n.
    # Contraction over the last dim of both operands (q @ k^T style), so no
    # explicit transpose of h is needed; bf16 operands, f32 accumulation.
    a_t = lax.dot_general(
        w2_ref[...], h.astype(jnp.bfloat16),
        dimension_numbers=(((1,), (1,)), ((), ())),
        preferred_element_type=jnp.float32,
    )
    a_ref[...] = (a_t + b2_ref[...]).astype(a_ref.dtype)


def _round_up(v, m):
    return ((v + m - 1) // m) * m


def _cdiv(a, b):
    return (a + b - 1) // b


def _vmem_capacity_bytes():
    try:
        return int(pltpu.get_tpu_info().vmem_capacity_bytes)
    except Exception:  # pragma: no cover - fallback if info API unavailable
        return 64 * 1024 * 1024          # conservative (v7x per-TC VMEM)


def _vmem_footprint(tn, L, D_pad, C_pad):
    """(total, resident, per_row) VMEM byte estimate for a row tile of tn."""
    # Weights/biases are resident; the pipeline still double-buffers them.
    resident = 2 * (L * D_pad * 2 + D_pad * 4 + C_pad * D_pad * 2 + C_pad * 4)
    # Per row: double-buffered x tile (assume f32 caller dtype) + in-kernel
    # bf16 copy, f32 hidden row + bf16 copy, double-buffered f32 output col.
    per_row = 2 * (L * 4) + L * 2 + D_pad * (4 + 2) + 2 * (C_pad * 4)
    return resident + per_row * tn, resident, per_row


def _pick_tile_n(N, L, D_pad, C_pad, budget):
    """Largest 128-multiple row tile (128..4096) fitting the VMEM budget."""
    _, resident, per_row = _vmem_footprint(0, L, D_pad, C_pad)
    avail = max(budget - resident, per_row * 128)
    t = max(128, min(4096, (avail // per_row) // 128 * 128))
    if N >= 256:                          # keep >= 2 grid steps (v7x: 2 TCs)
        t = min(t, _round_up(_cdiv(N, 2), 128))
    t = min(t, _round_up(N, 128))
    # Prefer an even grid-step count so v7x's two TensorCores stay balanced
    # under dimension_semantics=("parallel",); shrink by at most 4 notches.
    steps = _cdiv(N, t)
    if steps > 1 and steps % 2 == 1:
        for cand in range(t - 128, max(t - 512, 128) - 1, -128):
            if _cdiv(N, cand) % 2 == 0:
                t = cand
                break
    return t


def attn_net_forward(x, w1, b1, w2, b2, *, tile_n=None):
    """Pallas implementation of Attn_Net.forward.

    Args:
      x:  (N, L)  input features.
      w1: (D, L)  first Linear weight  (PyTorch layout).
      b1: (D,)    first Linear bias.
      w2: (C, D)  second Linear weight (PyTorch layout).
      b2: (C,)    second Linear bias.
    Returns:
      (A, x) with A of shape (N, C) — same as the PyTorch module.
    """
    N, L = x.shape
    D = w1.shape[0]
    C = w2.shape[0]
    C_pad = _round_up(C, 8)        # sublane-align the tiny class dim
    D_pad = _round_up(D, 128)      # lane-align the hidden dim (MXU 128-wide)

    cap = _vmem_capacity_bytes()
    tn = tile_n if tile_n is not None else _pick_tile_n(
        N, L, D_pad, C_pad, int(cap * 0.4))
    steps = _cdiv(N, tn)
    n_cols = steps * tn

    # x streamed at caller dtype (cast to bf16 in-kernel). No full-array pad:
    # the last block is ragged (OOB rows read undefined values, sliced off
    # below).  Only when the whole problem is smaller than one tile do we pad
    # (costs at most one tile copy and keeps that single DMA fully in-bounds).
    xf = x
    if N < tn:
        xf = jnp.pad(x, ((0, tn - N), (0, 0)))

    # Weights are tiny: cast/pad once in the wrapper, keep them resident.
    w1t = jnp.asarray(w1, jnp.bfloat16).T                      # (L, D)
    b1r = jnp.asarray(b1, jnp.float32).reshape(1, D)
    w2f = jnp.asarray(w2, jnp.bfloat16)                        # (C, D)
    b2f = jnp.asarray(b2, jnp.float32)
    if D_pad != D:
        w1t = jnp.pad(w1t, ((0, 0), (0, D_pad - D)))
        b1r = jnp.pad(b1r, ((0, 0), (0, D_pad - D)))
        w2f = jnp.pad(w2f, ((0, 0), (0, D_pad - D)))
    if C_pad != C:
        w2f = jnp.pad(w2f, ((0, C_pad - C), (0, 0)))
        b2f = jnp.pad(b2f, ((0, C_pad - C),))
    b2r = b2f.reshape(C_pad, 1)

    est_bytes, _, _ = _vmem_footprint(tn, L, D_pad, C_pad)
    vmem_limit = int(min(max(est_bytes + (8 << 20), 16 << 20), int(cap * 0.75)))

    cost = pl.CostEstimate(
        flops=2 * n_cols * L * D_pad + 2 * n_cols * D_pad * C_pad,
        transcendentals=n_cols * D_pad,
        bytes_accessed=(N * L * x.dtype.itemsize            # x (caller dtype)
                        + L * D_pad * 2                     # W1^T (bf16)
                        + D_pad * 4 + C_pad * D_pad * 2 + C_pad * 4
                        + C_pad * n_cols * 4),              # output (f32)
    )

    a_t = pl.pallas_call(
        _attn_net_kernel,
        out_shape=jax.ShapeDtypeStruct((C_pad, n_cols), jnp.float32),
        grid_spec=pltpu.PrefetchScalarGridSpec(
            num_scalar_prefetch=0,
            grid=(steps,),
            in_specs=[
                pl.BlockSpec((tn, L), lambda i: (i, 0)),          # x (streamed)
                pl.BlockSpec((L, D_pad), lambda i: (0, 0)),       # W1^T (resident)
                pl.BlockSpec((1, D_pad), lambda i: (0, 0)),       # b1
                pl.BlockSpec((C_pad, D_pad), lambda i: (0, 0)),   # W2 (resident)
                pl.BlockSpec((C_pad, 1), lambda i: (0, 0)),       # b2
            ],
            out_specs=pl.BlockSpec((C_pad, tn), lambda i: (0, i)),  # lane-dense A^T
        ),
        compiler_params=pltpu.CompilerParams(
            dimension_semantics=("parallel",),
            vmem_limit_bytes=vmem_limit,
        ),
        cost_estimate=cost,
    )(xf, w1t, b1r, w2f, b2r)

    a = a_t[:C, :N].T                         # (N, C): drop class/row padding
    return a, x


def _init_params(key, L, D, C):
    """Deterministic synthetic parameter init (shapes match nn.Linear)."""
    k1, k2, k3, k4 = jax.random.split(key, 4)
    lim1 = 1.0 / jnp.sqrt(jnp.float32(L))
    lim2 = 1.0 / jnp.sqrt(jnp.float32(D))
    w1 = jax.random.uniform(k1, (D, L), jnp.float32, -lim1, lim1)
    b1 = jax.random.uniform(k2, (D,), jnp.float32, -lim1, lim1)
    w2 = jax.random.uniform(k3, (C, D), jnp.float32, -lim2, lim2)
    b2 = jax.random.uniform(k4, (C,), jnp.float32, -lim2, lim2)
    return w1, b1, w2, b2


if __name__ == "__main__":
    # Small shapes consistent with the module (defaults L=1024, D=256, C=1).
    # N deliberately NOT a multiple of the tile size to exercise the tail path.
    N, L, D, C = 40, 256, 128, 1

    key = jax.random.PRNGKey(0)
    kx, kp = jax.random.split(key)
    x = jax.random.normal(kx, (N, L), jnp.float32)
    w1, b1, w2, b2 = _init_params(kp, L, D, C)

    a, x_out = attn_net_forward(x, w1, b1, w2, b2)
    jax.block_until_ready(a)
    jax.block_until_ready(x_out)

    # Reference (numpy, full f32) — bf16 MXU inputs with f32 accum => loose tol.
    xn, w1n, b1n, w2n, b2n = (np.asarray(t) for t in (x, w1, b1, w2, b2))
    a_ref = np.tanh(xn @ w1n.T + b1n) @ w2n.T + b2n
    assert a.shape == (N, C), f"bad output shape {a.shape}"
    err = float(np.max(np.abs(np.asarray(a) - a_ref)))
    assert err < 2e-2, f"mismatch vs reference: max abs err = {err}"
    assert x_out is x      # identity passthrough, same as PyTorch returning x

    print("KERNEL_OK")
</pallas_src>

<mosaic_0001>
module attributes {stable_mosaic.version = 11 : i64} {
  func.func @_attn_net_kernel(%arg0: i32, %arg1: memref<128x256xf32, #tpu.memory_space<vmem>>, %arg2: memref<256x128xbf16, #tpu.memory_space<vmem>>, %arg3: memref<1x128xf32, #tpu.memory_space<vmem>>, %arg4: memref<8x128xbf16, #tpu.memory_space<vmem>>, %arg5: memref<8x1xf32, #tpu.memory_space<vmem>>, %arg6: memref<8x128xf32, #tpu.memory_space<vmem>>) attributes {dimension_semantics = [#tpu.dimension_semantics<parallel>], iteration_bounds = array<i64: 1>, scalar_prefetch = 0 : i64, scratch_operands = 0 : i64, tpu.core_type = #tpu.core_type<tc>, window_params = [{transform_indices = @transform_0, window_bounds = array<i64: 128, 256>}, {pipeline_mode = #tpu.pipeline_mode<synchronous>, transform_indices = @transform_1, window_bounds = array<i64: 256, 128>}, {pipeline_mode = #tpu.pipeline_mode<synchronous>, transform_indices = @transform_2, window_bounds = array<i64: 1, 128>}, {pipeline_mode = #tpu.pipeline_mode<synchronous>, transform_indices = @transform_3, window_bounds = array<i64: 8, 128>}, {pipeline_mode = #tpu.pipeline_mode<synchronous>, transform_indices = @transform_4, window_bounds = array<i64: 8, 1>}, {transform_indices = @transform_5, window_bounds = array<i64: 8, 128>}]} {
    %c0 = arith.constant 0 : index
    %c0_0 = arith.constant 0 : index
    %0 = vector.load %arg1[%c0, %c0_0] : memref<128x256xf32, #tpu.memory_space<vmem>>, vector<128x256xf32>
    %1 = arith.truncf %0 : vector<128x256xf32> to vector<128x256xbf16>
    %c0_1 = arith.constant 0 : index
    %c0_2 = arith.constant 0 : index
    %2 = vector.load %arg2[%c0_1, %c0_2] : memref<256x128xbf16, #tpu.memory_space<vmem>>, vector<256x128xbf16>
    %cst = arith.constant dense<0.000000e+00> : vector<128x128xf32>
    %3 = tpu.matmul %1, %2, %cst {dimension_numbers = #tpu.dot_dimension_numbers<[1], [0], [0], [1], [0, 0, 1, 1], [], []>} : vector<128x256xbf16>, vector<256x128xbf16>, vector<128x128xf32> -> vector<128x128xf32>
    %c0_3 = arith.constant 0 : index
    %c0_4 = arith.constant 0 : index
    %4 = vector.load %arg3[%c0_3, %c0_4] : memref<1x128xf32, #tpu.memory_space<vmem>>, vector<1x128xf32>
    %5 = vector.broadcast %4 : vector<1x128xf32> to vector<128x128xf32>
    %6 = arith.addf %3, %5 : vector<128x128xf32>
    %7 = math.tanh %6 : vector<128x128xf32>
    %c0_5 = arith.constant 0 : index
    %c0_6 = arith.constant 0 : index
    %8 = vector.load %arg4[%c0_5, %c0_6] : memref<8x128xbf16, #tpu.memory_space<vmem>>, vector<8x128xbf16>
    %9 = arith.truncf %7 : vector<128x128xf32> to vector<128x128xbf16>
    %cst_7 = arith.constant dense<0.000000e+00> : vector<8x128xf32>
    %10 = tpu.matmul %8, %9, %cst_7 {dimension_numbers = #tpu.dot_dimension_numbers<[1], [1], [0], [0], [0, 0, 1, 0], [], []>} : vector<8x128xbf16>, vector<128x128xbf16>, vector<8x128xf32> -> vector<8x128xf32>
    %c0_8 = arith.constant 0 : index
    %c0_9 = arith.constant 0 : index
    %11 = vector.load %arg5[%c0_8, %c0_9] : memref<8x1xf32, #tpu.memory_space<vmem>>, vector<8x1xf32>
    %12 = vector.broadcast %11 : vector<8x1xf32> to vector<8x128xf32>
    %13 = arith.addf %10, %12 : vector<8x128xf32>
    %c0_10 = arith.constant 0 : index
    %c0_11 = arith.constant 0 : index
    %14 = vector.load %arg6[%c0_10, %c0_11] : memref<8x128xf32, #tpu.memory_space<vmem>>, vector<8x128xf32>
    tpu.vector_store %arg6[%c0_10, %c0_11], %13 {strides = array<i32>} : memref<8x128xf32, #tpu.memory_space<vmem>>, vector<8x128xf32>,
    return
  }
  func.func @transform_0(%arg0: i32) -> (i32, i32) {
    %c0_i32 = arith.constant 0 : i32
    %c0_i32_0 = arith.constant 0 : i32
    return %arg0, %c0_i32 : i32, i32
  }
  func.func @transform_1(%arg0: i32) -> (i32, i32) {
    %c0_i32 = arith.constant 0 : i32
    %c0_i32_0 = arith.constant 0 : i32
    %c0_i32_1 = arith.constant 0 : i32
    return %c0_i32, %c0_i32_0 : i32, i32
  }
  func.func @transform_2(%arg0: i32) -> (i32, i32) {
    %c0_i32 = arith.constant 0 : i32
    %c0_i32_0 = arith.constant 0 : i32
    %c0_i32_1 = arith.constant 0 : i32
    return %c0_i32, %c0_i32_0 : i32, i32
  }
  func.func @transform_3(%arg0: i32) -> (i32, i32) {
    %c0_i32 = arith.constant 0 : i32
    %c0_i32_0 = arith.constant 0 : i32
    %c0_i32_1 = arith.constant 0 : i32
    return %c0_i32, %c0_i32_0 : i32, i32
  }
  func.func @transform_4(%arg0: i32) -> (i32, i32) {
    %c0_i32 = arith.constant 0 : i32
    %c0_i32_0 = arith.constant 0 : i32
    %c0_i32_1 = arith.constant 0 : i32
    return %c0_i32, %c0_i32_0 : i32, i32
  }
  func.func @transform_5(%arg0: i32) -> (i32, i32) {
    %c0_i32 = arith.constant 0 : i32
    %c0_i32_0 = arith.constant 0 : i32
    return %c0_i32, %arg0 : i32, i32
  }
}

</mosaic_0001>

<llo_original>
// kernel: tpu_custom_call.1
$region0: #{tpu_custom_call.1}
  #allocation0 [shape = 'u32[]', space=smem, size = 0x4, offset = 0x4, fixed_abs, tag = 'smem constant byte address 0x4 - core index']
  #allocation1 [shape = 'u32[144,128]{1,0:T(1,128)}', space=vmem, size = 0x12000, scoped, tag = 'internal scratch']
  %s0 = inlined_call_operand.hbm [shape: f32[128,256], index: 0, kind: input, shape index: {}]
  %s1 = inlined_call_operand.hbm [shape: bf16[256,128], index: 1, kind: input, shape index: {}]
  %s2 = inlined_call_operand.vmem [shape: f32[1,128], index: 2, kind: input, shape index: {}]
  %s3 = inlined_call_operand.vmem [shape: bf16[8,128], index: 3, kind: input, shape index: {}]
  %s4 = inlined_call_operand.vmem [shape: f32[8,1], index: 4, kind: input, shape index: {}]
  %s5 = inlined_call_operand.hbm [shape: f32[8,128], index: 5, kind: output, shape index: {}]
  %s6 = sld [smem:[#allocation0]]
  $region38: #{tpu_custom_call.1} parent=0
    _
  %s8 = ssub.s32 1, %s6
  %s9 = scalar_select 0, %s8, %s6
  $region1: #{tpu_custom_call.1} parent=0
    #allocation2 [shape = 'u8[131072]{0}', space=vmem, size = 0x20000, scoped, tag = 'input window, operand 0, single buffered']
    #allocation3 [shape = 's32[1]{0}', space=sflag, size = 0x4, scoped, tag = 'scoped memory for tpu_custom_call.1']
    #allocation4 [shape = 's32[1]{0}', space=sflag, size = 0x4, scoped, tag = 'scoped memory for tpu_custom_call.1']
    #allocation5 [shape = 'u8[65536]{0}', space=vmem, size = 0x10000, scoped, tag = 'input window, operand 1, single buffered']
    #allocation6 [shape = 's32[1]{0}', space=sflag, size = 0x4, scoped, tag = 'scoped memory for tpu_custom_call.1']
    #allocation7 [shape = 'u8[4096]{0}', space=vmem, size = 0x1000, scoped, tag = 'output window, operand 0, single buffered']
    %10 = vsyncpa [#allocation3], 0
    %11 = vsyncpa [#allocation6], 0
    %12 = vsyncpa [#allocation4], 0
    // Predicated region
    $region2: #{tpu_custom_call.1} parent=1 // pred_check
      _
    $region3: #{tpu_custom_call.1} parent=1 // pred_check_branch
      %14 = sbr.rel (0) target = $region5
    $region4: #{tpu_custom_call.1} parent=1 // pred_region
      %s16 = ssub.s32 4096, 4096
      %17 = vsyncadd [#allocation3], %s16
      %s18 = sshll.u32 [#allocation2], 4
      %s19 = int_to_ptr.vmem [resolvable:$true] %s18
      %24 = dma.hbm_to_vmem [thread:$0]  %s0, 4096, %s19, [#allocation3], 256, 256, 16
    $region5: #{tpu_custom_call.1} parent=1 // pred_fallthru
      _
    // Predicated region
    $region6: #{tpu_custom_call.1} parent=1 // pred_check
      _
    $region7: #{tpu_custom_call.1} parent=1 // pred_check_branch
      %26 = sbr.rel (0) target = $region9
    $region8: #{tpu_custom_call.1} parent=1 // pred_region
      %s28 = ssub.s32 2048, 2048
      %29 = vsyncadd [#allocation6], %s28
      %s30 = sshll.u32 [#allocation5], 4
      %s31 = int_to_ptr.vmem [resolvable:$true] %s30
      %36 = dma.hbm_to_vmem [thread:$0]  %s1, 2048, %s31, [#allocation6], 64, 64, 4
    $region9: #{tpu_custom_call.1} parent=1 // pred_fallthru
      _
    // Predicated region
    $region10: #{tpu_custom_call.1} parent=1 // pred_check
      _
    $region11: #{tpu_custom_call.1} parent=1 // pred_check_branch
      %38 = sbr.rel (0) target = $region13
    $region12: #{tpu_custom_call.1} parent=1 // pred_region
      _
    $region13: #{tpu_custom_call.1} parent=1 // pred_fallthru
      _
    // Predicated region
    $region14: #{tpu_custom_call.1} parent=1 // pred_check
      _
    $region15: #{tpu_custom_call.1} parent=1 // pred_check_branch
      %40 = sbr.rel (0) target = $region17
    $region16: #{tpu_custom_call.1} parent=1 // pred_region
      _
    $region17: #{tpu_custom_call.1} parent=1 // pred_fallthru
      _
    // Predicated region
    $region18: #{tpu_custom_call.1} parent=1 // pred_check
      _
    $region19: #{tpu_custom_call.1} parent=1 // pred_check_branch
      %42 = sbr.rel (0) target = $region21
    $region20: #{tpu_custom_call.1} parent=1 // pred_region
      _
    $region21: #{tpu_custom_call.1} parent=1 // pred_fallthru
      _
    // Predicated region
    $region22: #{tpu_custom_call.1} parent=1 // pred_check
      _
    $region23: #{tpu_custom_call.1} parent=1 // pred_check_branch
      %44 = sbr.rel (0) target = $region25
    $region24: #{tpu_custom_call.1} parent=1 // pred_region
      %45 = dma.done [#allocation3], 4096
    $region25: #{tpu_custom_call.1} parent=1 // pred_fallthru
      _
    // Predicated region
    $region26: #{tpu_custom_call.1} parent=1 // pred_check
      _
    $region27: #{tpu_custom_call.1} parent=1 // pred_check_branch
      %47 = sbr.rel (0) target = $region29
    $region28: #{tpu_custom_call.1} parent=1 // pred_region
      %48 = dma.done [#allocation6], 2048
    $region29: #{tpu_custom_call.1} parent=1 // pred_fallthru
      _
    %v50 = vld [vmem:[#allocation2] sm:$0xff]
    %v51 = vld [vmem:[#allocation2 + $0x8] sm:$0xff]
    %v52 = vld [vmem:[#allocation2 + $0x10] sm:$0xff]
    %v53 = vld [vmem:[#allocation2 + $0x18] sm:$0xff]
    %v54 = vld [vmem:[#allocation2 + $0x20] sm:$0xff]
    %v55 = vld [vmem:[#allocation2 + $0x28] sm:$0xff]
    %v56 = vld [vmem:[#allocation2 + $0x30] sm:$0xff]
    %v57 = vld [vmem:[#allocation2 + $0x38] sm:$0xff]
    %v58 = vld [vmem:[#allocation2 + $0x40] sm:$0xff]
    %v59 = vld [vmem:[#allocation2 + $0x48] sm:$0xff]
    %v60 = vld [vmem:[#allocation2 + $0x50] sm:$0xff]
    %v61 = vld [vmem:[#allocation2 + $0x58] sm:$0xff]
    %v62 = vld [vmem:[#allocation2 + $0x60] sm:$0xff]
    %v63 = vld [vmem:[#allocation2 + $0x68] sm:$0xff]
    %v64 = vld [vmem:[#allocation2 + $0x70] sm:$0xff]
    %v65 = vld [vmem:[#allocation2 + $0x78] sm:$0xff]
    %v66 = vld [vmem:[#allocation2 + $0x80] sm:$0xff]
    %v67 = vld [vmem:[#allocation2 + $0x88] sm:$0xff]
    %v68 = vld [vmem:[#allocation2 + $0x90] sm:$0xff]
    %v69 = vld [vmem:[#allocation2 + $0x98] sm:$0xff]
    %v70 = vld [vmem:[#allocation2 + $0xa0] sm:$0xff]
    %v71 = vld [vmem:[#allocation2 + $0xa8] sm:$0xff]
    %v72 = vld [vmem:[#allocation2 + $0xb0] sm:$0xff]
    %v73 = vld [vmem:[#allocation2 + $0xb8] sm:$0xff]
    %v74 = vld [vmem:[#allocation2 + $0xc0] sm:$0xff]
    %v75 = vld [vmem:[#allocation2 + $0xc8] sm:$0xff]
    %v76 = vld [vmem:[#allocation2 + $0xd0] sm:$0xff]
    %v77 = vld [vmem:[#allocation2 + $0xd8] sm:$0xff]
    %v78 = vld [vmem:[#allocation2 + $0xe0] sm:$0xff]
    %v79 = vld [vmem:[#allocation2 + $0xe8] sm:$0xff]
    %v80 = vld [vmem:[#allocation2 + $0xf0] sm:$0xff]
    %v81 = vld [vmem:[#allocation2 + $0xf8] sm:$0xff]
    %v82 = vpack.c.bf16 %v52, %v50
    %v83 = vpack.c.bf16 %v53, %v51
    %v84 = vpack.c.bf16 %v56, %v54
    %v85 = vpack.c.bf16 %v57, %v55
    %v86 = vpack.c.bf16 %v60, %v58
    %v87 = vpack.c.bf16 %v61, %v59
    %v88 = vpack.c.bf16 %v64, %v62
    %v89 = vpack.c.bf16 %v65, %v63
    %v90 = vpack.c.bf16 %v68, %v66
    %v91 = vpack.c.bf16 %v69, %v67
    %v92 = vpack.c.bf16 %v72, %v70
    %v93 = vpack.c.bf16 %v73, %v71
    %v94 = vpack.c.bf16 %v76, %v74
    %v95 = vpack.c.bf16 %v77, %v75
    %v96 = vpack.c.bf16 %v80, %v78
    %v97 = vpack.c.bf16 %v81, %v79
    %v98 = vld [vmem:[#allocation5] sm:$0xf]
    %v99 = vld [vmem:[#allocation5 + $0x4] sm:$0xf]
    %v100 = vld [vmem:[#allocation5 + $0x8] sm:$0xf]
    %v101 = vld [vmem:[#allocation5 + $0xc] sm:$0xf]
    %v102 = vld [vmem:[#allocation5 + $0x10] sm:$0xf]
    %v103 = vld [vmem:[#allocation5 + $0x14] sm:$0xf]
    %v104 = vld [vmem:[#allocation5 + $0x18] sm:$0xf]
    %v105 = vld [vmem:[#allocation5 + $0x1c] sm:$0xf]
    %v106 = vld [vmem:[#allocation5 + $0x20] sm:$0xf]
    %v107 = vld [vmem:[#allocation5 + $0x24] sm:$0xf]
    %v108 = vld [vmem:[#allocation5 + $0x28] sm:$0xf]
    %v109 = vld [vmem:[#allocation5 + $0x2c] sm:$0xf]
    %v110 = vld [vmem:[#allocation5 + $0x30] sm:$0xf]
    %v111 = vld [vmem:[#allocation5 + $0x34] sm:$0xf]
    %v112 = vld [vmem:[#allocation5 + $0x38] sm:$0xf]
    %v113 = vld [vmem:[#allocation5 + $0x3c] sm:$0xf]
    %v114 = vld [vmem:[#allocation5 + $0x40] sm:$0xf]
    %v115 = vld [vmem:[#allocation5 + $0x44] sm:$0xf]
    %v116 = vld [vmem:[#allocation5 + $0x48] sm:$0xf]
    %v117 = vld [vmem:[#allocation5 + $0x4c] sm:$0xf]
    %v118 = vld [vmem:[#allocation5 + $0x50] sm:$0xf]
    %v119 = vld [vmem:[#allocation5 + $0x54] sm:$0xf]
    %v120 = vld [vmem:[#allocation5 + $0x58] sm:$0xf]
    %v121 = vld [vmem:[#allocation5 + $0x5c] sm:$0xf]
    %v122 = vld [vmem:[#allocation5 + $0x60] sm:$0xf]
    %v123 = vld [vmem:[#allocation5 + $0x64] sm:$0xf]
    %v124 = vld [vmem:[#allocation5 + $0x68] sm:$0xf]
    %v125 = vld [vmem:[#allocation5 + $0x6c] sm:$0xf]
    %v126 = vld [vmem:[#allocation5 + $0x70] sm:$0xf]
    %v127 = vld [vmem:[#allocation5 + $0x74] sm:$0xf]
    %v128 = vld [vmem:[#allocation5 + $0x78] sm:$0xf]
    %v129 = vld [vmem:[#allocation5 + $0x7c] sm:$0xf]
    %v130 = vld [vmem:[%s2] sm:$0x1]
    %v132 = vlaneseq
    %v133 = vshrl.u32 %v132, 7
    %v134 = vsub.s32 0, %v133
    %v135 = vrot.slane %v130, %v134
    %v169 = vunpack.c.l.b16 %v98
    %v170 = vunpack.c.l.b16 %v99
    %v171 = vunpack.c.l.b16 %v100
    %v172 = vunpack.c.l.b16 %v101
    %v173 = vunpack.c.l.b16 %v102
    %v174 = vunpack.c.l.b16 %v103
    %v175 = vunpack.c.l.b16 %v104
    %v176 = vunpack.c.l.b16 %v105
    %v177 = vunpack.c.l.b16 %v106
    %v178 = vunpack.c.l.b16 %v107
    %v179 = vunpack.c.l.b16 %v108
    %v180 = vunpack.c.l.b16 %v109
    %v181 = vunpack.c.l.b16 %v110
    %v182 = vunpack.c.l.b16 %v111
    %v183 = vunpack.c.l.b16 %v112
    %v184 = vunpack.c.l.b16 %v113
    %v185 = vunpack.c.l.b16 %v114
    %v186 = vunpack.c.l.b16 %v115
    %v187 = vunpack.c.l.b16 %v116
    %v188 = vunpack.c.l.b16 %v117
    %v189 = vunpack.c.l.b16 %v118
    %v190 = vunpack.c.l.b16 %v119
    %v191 = vunpack.c.l.b16 %v120
    %v192 = vunpack.c.l.b16 %v121
    %v193 = vunpack.c.l.b16 %v122
    %v194 = vunpack.c.l.b16 %v123
    %v195 = vunpack.c.l.b16 %v124
    %v196 = vunpack.c.l.b16 %v125
    %v197 = vunpack.c.l.b16 %v126
    %v198 = vunpack.c.l.b16 %v127
    %v199 = vunpack.c.l.b16 %v128
    %v200 = vunpack.c.l.b16 %v129
    %v201 = vpack.c.b16 %v170, %v169
    %v202 = vpack.c.b16 %v172, %v171
    %v203 = vpack.c.b16 %v174, %v173
    %v204 = vpack.c.b16 %v176, %v175
    %v205 = vpack.c.b16 %v178, %v177
    %v206 = vpack.c.b16 %v180, %v179
    %v207 = vpack.c.b16 %v182, %v181
    %v208 = vpack.c.b16 %v184, %v183
    %v209 = vpack.c.b16 %v186, %v185
    %v210 = vpack.c.b16 %v188, %v187
    %v211 = vpack.c.b16 %v190, %v189
    %v212 = vpack.c.b16 %v192, %v191
    %v213 = vpack.c.b16 %v194, %v193
    %v214 = vpack.c.b16 %v196, %v195
    %v215 = vpack.c.b16 %v198, %v197
    %v216 = vpack.c.b16 %v200, %v199
    %233 = vmatprep.subr.bf16.mxu0 0
    %234 = vmatpush1.bf16.msra.mxu0 %v201
    %235 = vmatprep.subr.bf16.mxu0 0
    %236 = vmatpush1.bf16.msra.mxu0 %v202
    %237 = vmatprep.subr.bf16.mxu0 0
    %238 = vmatpush1.bf16.msra.mxu0 %v203
    %239 = vmatprep.subr.bf16.mxu0 0
    %240 = vmatpush1.bf16.msra.mxu0 %v204
    %241 = vmatprep.subr.bf16.mxu0 0
    %242 = vmatpush1.bf16.msra.mxu0 %v205
    %243 = vmatprep.subr.bf16.mxu0 0
    %244 = vmatpush1.bf16.msra.mxu0 %v206
    %245 = vmatprep.subr.bf16.mxu0 0
    %246 = vmatpush1.bf16.msra.mxu0 %v207
    %247 = vmatprep.subr.bf16.mxu0 0
    %248 = vmatpush1.bf16.msra.mxu0 %v208
    %249 = vmatprep.subr.bf16.mxu0 0
    %250 = vmatpush1.bf16.msra.mxu0 %v209
    %251 = vmatprep.subr.bf16.mxu0 0
    %252 = vmatpush1.bf16.msra.mxu0 %v210
    %253 = vmatprep.subr.bf16.mxu0 0
    %254 = vmatpush1.bf16.msra.mxu0 %v211
    %255 = vmatprep.subr.bf16.mxu0 0
    %256 = vmatpush1.bf16.msra.mxu0 %v212
    %257 = vmatprep.subr.bf16.mxu0 0
    %258 = vmatpush1.bf16.msra.mxu0 %v213
    %259 = vmatprep.subr.bf16.mxu0 0
    %260 = vmatpush1.bf16.msra.mxu0 %v214
    %261 = vmatprep.subr.bf16.mxu0 0
    %262 = vmatpush1.bf16.msra.mxu0 %v215
    %263 = vmatprep.subr.bf16.mxu0 0
    %264 = vmatpush1.bf16.msra.mxu0 %v216
    %265 = vmatprep.mubr.bf16.mxu0 %v83
    %266 = vmatmul.mubr.bf16.gmra.mrb[0].mxu0 %v82
    %v267 = vpop.f32.mrb[0].mxu0
    %v268 = vadd.f32 %v135, %v267
    %v269 = vpop.f32.mrb[0].mxu0
    %v270 = vpop.f32.mrb[0].mxu0
    %v271 = vadd.f32 %v135, %v270
    %v272 = vpop.f32.mrb[0].mxu0
    %273 = vmatprep.mubr.bf16.mxu0 %v85
    %274 = vmatmul.mubr.bf16.gmra.mrb[0].mxu0 %v84
    %v275 = vpop.f32.mrb[0].mxu0
    %v276 = vadd.f32 %v135, %v275
    %v277 = vpop.f32.mrb[0].mxu0
    %v278 = vpop.f32.mrb[0].mxu0
    %v279 = vadd.f32 %v135, %v278
    %v280 = vpop.f32.mrb[0].mxu0
    %281 = vmatprep.mubr.bf16.mxu0 %v87
    %282 = vmatmul.mubr.bf16.gmra.mrb[0].mxu0 %v86
    %v283 = vpop.f32.mrb[0].mxu0
    %v284 = vadd.f32 %v135, %v283
    %v285 = vpop.f32.mrb[0].mxu0
    %v286 = vpop.f32.mrb[0].mxu0
    %v287 = vadd.f32 %v135, %v286
    %v288 = vpop.f32.mrb[0].mxu0
    %289 = vmatprep.mubr.bf16.mxu0 %v89
    %290 = vmatmul.mubr.bf16.gmra.mrb[0].mxu0 %v88
    %v291 = vpop.f32.mrb[0].mxu0
    %v292 = vadd.f32 %v135, %v291
    %v293 = vpop.f32.mrb[0].mxu0
    %v294 = vpop.f32.mrb[0].mxu0
    %v295 = vadd.f32 %v135, %v294
    %v296 = vpop.f32.mrb[0].mxu0
    %297 = vmatprep.mubr.bf16.mxu0 %v91
    %298 = vmatmul.mubr.bf16.gmra.mrb[0].mxu0 %v90
    %v299 = vpop.f32.mrb[0].mxu0
    %v300 = vadd.f32 %v135, %v299
    %v301 = vpop.f32.mrb[0].mxu0
    %v302 = vpop.f32.mrb[0].mxu0
    %v303 = vadd.f32 %v135, %v302
    %v304 = vpop.f32.mrb[0].mxu0
    %305 = vmatprep.mubr.bf16.mxu0 %v93
    %306 = vmatmul.mubr.bf16.gmra.mrb[0].mxu0 %v92
    %v307 = vpop.f32.mrb[0].mxu0
    %v308 = vadd.f32 %v135, %v307
    %v309 = vpop.f32.mrb[0].mxu0
    %v310 = vpop.f32.mrb[0].mxu0
    %v311 = vadd.f32 %v135, %v310
    %v312 = vpop.f32.mrb[0].mxu0
    %313 = vmatprep.mubr.bf16.mxu0 %v95
    %314 = vmatmul.mubr.bf16.gmra.mrb[0].mxu0 %v94
    %v315 = vpop.f32.mrb[0].mxu0
    %v316 = vadd.f32 %v135, %v315
    %v317 = vpop.f32.mrb[0].mxu0
    %v318 = vpop.f32.mrb[0].mxu0
    %v319 = vadd.f32 %v135, %v318
    %v320 = vpop.f32.mrb[0].mxu0
    %321 = vmatprep.mubr.bf16.mxu0 %v97
    %322 = vmatmul.mubr.bf16.gmra.mrb[0].mxu0 %v96
    %v323 = vpop.f32.mrb[0].mxu0
    %v324 = vadd.f32 %v135, %v323
    %v325 = vpop.f32.mrb[0].mxu0
    %v326 = vpop.f32.mrb[0].mxu0
    %v327 = vadd.f32 %v135, %v326
    %v328 = vpop.f32.mrb[0].mxu0
    %329 = vdwg.mxu0
    %v330 = vtanh.pop %v268
    %v331 = vtanh.pop %v271
    %v332 = vtanh.pop %v276
    %v333 = vtanh.pop %v279
    %v334 = vtanh.pop %v284
    %v335 = vtanh.pop %v287
    %v336 = vtanh.pop %v292
    %v337 = vtanh.pop %v295
    %v338 = vtanh.pop %v300
    %v339 = vtanh.pop %v303
    %v340 = vtanh.pop %v308
    %v341 = vtanh.pop %v311
    %v342 = vtanh.pop %v316
    %v343 = vtanh.pop %v319
    %v344 = vtanh.pop %v324
    %v345 = vtanh.pop %v327
    %v346 = vld [vmem:[%s3] sm:$0xf]
    %v347 = vpack.c.bf16 %v331, %v330
    %v348 = vpack.c.bf16 %v333, %v332
    %v349 = vpack.c.bf16 %v335, %v334
    %v350 = vpack.c.bf16 %v337, %v336
    %v351 = vpack.c.bf16 %v339, %v338
    %v352 = vpack.c.bf16 %v341, %v340
    %v353 = vpack.c.bf16 %v343, %v342
    %v354 = vpack.c.bf16 %v345, %v344
    %v355 = vld [vmem:[%s4] sm:$0xff]
    %357 = vset.pattern.permute.xlu0 0
    %358 = vperm.xlu0 %357, %v355
    %v359 = vpop.permute.xlu0 %358
    %361 = vmatprep.subr.bf16.mxu0 0
    %362 = vmatpush1.bf16.xpose.msra.mxu0 %v347
    %363 = vmatprep.subr.bf16.mxu0 0
    %364 = vmatpush1.bf16.xpose.msra.mxu0 %v348
    %365 = vmatprep.subr.bf16.mxu0 0
    %366 = vmatpush1.bf16.xpose.msra.mxu0 %v349
    %367 = vmatprep.subr.bf16.mxu0 0
    %368 = vmatpush1.bf16.xpose.msra.mxu0 %v350
    %369 = vmatprep.subr.bf16.mxu0 0
    %370 = vmatpush1.bf16.xpose.msra.mxu0 %v351
    %371 = vmatprep.subr.bf16.mxu0 0
    %372 = vmatpush1.bf16.xpose.msra.mxu0 %v352
    %373 = vmatprep.subr.bf16.mxu0 0
    %374 = vmatpush1.bf16.xpose.msra.mxu0 %v353
    %375 = vmatprep.subr.bf16.mxu0 0
    %376 = vmatpush1.bf16.xpose.msra.mxu0 %v354
    %377 = vmatprep.subr.bf16.mxu0 0
    %378 = vmatpush1.bf16.xpose.msra.mxu0 0
    %379 = vmatprep.subr.bf16.mxu0 0
    %380 = vmatpush1.bf16.xpose.msra.mxu0 0
    %381 = vmatprep.subr.bf16.mxu0 0
    %382 = vmatpush1.bf16.xpose.msra.mxu0 0
    %383 = vmatprep.subr.bf16.mxu0 0
    %384 = vmatpush1.bf16.xpose.msra.mxu0 0
    %385 = vmatprep.subr.bf16.mxu0 0
    %386 = vmatpush1.bf16.xpose.msra.mxu0 0
    %387 = vmatprep.subr.bf16.mxu0 0
    %388 = vmatpush1.bf16.xpose.msra.mxu0 0
    %389 = vmatprep.subr.bf16.mxu0 0
    %390 = vmatpush1.bf16.xpose.msra.mxu0 0
    %391 = vmatprep.subr.bf16.mxu0 0
    %392 = vmatpush1.bf16.xpose.msra.mxu0 0
    %393 = vmatprep.mubr.bf16.mxu0 0
    %394 = vmatmul.mubr.bf16.gmra.mrb[0].mxu0 %v346
    %v395 = vpop.f32.mrb[0].mxu0
    %v396 = vadd.f32 %v359, %v395
    %v397 = vpop.f32.mrb[0].mxu0
    %v398 = vpop.f32.mrb[0].mxu0
    %v399 = vpop.f32.mrb[0].mxu0
    %400 = vdwg.mxu0
    %401 = vst [vmem:[#allocation7] sm:$0xff] %v396
    // Predicated region
    $region30: #{tpu_custom_call.1} parent=1 // pred_check
      _
    $region31: #{tpu_custom_call.1} parent=1 // pred_check_branch
      %403 = sbr.rel (0) target = $region33
    $region32: #{tpu_custom_call.1} parent=1 // pred_region
      %s405 = ssub.s32 128, 128
      %406 = vsyncadd [#allocation4], %s405
      %s408 = sshll.u32 [#allocation7], 4
      %s409 = int_to_ptr.vmem [resolvable:$true] %s408
      %411 = dma.vmem_to_hbm [thread:$0]  %s409, 128, %s5, [#allocation4]
    $region33: #{tpu_custom_call.1} parent=1 // pred_fallthru
      _
    // Predicated region
    $region34: #{tpu_custom_call.1} parent=1 // pred_check
      _
    $region35: #{tpu_custom_call.1} parent=1 // pred_check_branch
      %413 = sbr.rel (0) target = $region37
    $region36: #{tpu_custom_call.1} parent=1 // pred_region
      %414 = dma.done [#allocation4], 128
    $region37: #{tpu_custom_call.1} parent=1 // pred_fallthru
      _
    %415 = vsyncpa [#allocation3], 1
    %416 = vsyncpa [#allocation6], 1
    %417 = vsyncpa [#allocation4], 1

</llo_original>
